<compile_context>
chip_gen: v6e
topology: v6e:2x2x1
jax: 0.10.0
libtpu: 0.0.40
codegen_flags: <defaults>
</compile_context>

<pallas_src>
import jax
import jax.numpy as jnp
from jax.experimental import pallas as pl
from jax.experimental.pallas import tpu as pltpu


# ---------------------------------------------------------------------------
# Per-generation VMEM budgeting
# ---------------------------------------------------------------------------

def _vmem_capacity_bytes():
    """Physical VMEM per TensorCore; conservative 64 MiB (v7x) fallback."""
    try:
        info = pltpu.get_tpu_info()
        for attr in ("vmem_capacity_bytes", "vmem_size_bytes", "vmem_bytes"):
            v = getattr(info, attr, None)
            if isinstance(v, int) and v > 0:
                return v
    except Exception:
        pass
    return 64 * 1024 * 1024


# ---------------------------------------------------------------------------
# Wrapper + kernels
# ---------------------------------------------------------------------------

def attention_module_3d(x, w1, w2, *, force_path=None):
    """x: (B, C, D, H, W); w1: (C//r, C); w2: (C, C//r) (PyTorch Linear weights).

    force_path: None (auto), "fused" or "tiled" (static; used by tests).
    """
    B, C, D, H, W = x.shape
    S = D * H * W
    Cr = w1.shape[0]
    itemsize = jnp.dtype(x.dtype).itemsize

    vmem_cap = _vmem_capacity_bytes()
    vmem_limit = int(vmem_cap * 3 // 4)        # 96 MiB on v5e/v6e, 48 MiB on v7x
    per_buf_budget = vmem_limit // 8           # per (tC, tS) block (4x double-buffered)
    fused_budget = vmem_limit // 6             # per (C, S) batch slab (4x double-buffered)

    xf = x.reshape(B, C, S)

    use_fused = (C * S * itemsize) <= fused_budget
    if force_path == "fused":
        use_fused = True
    elif force_path == "tiled":
        use_fused = False

    inv_S = 1.0 / S

    # ------------------------------------------------------------------
    # Fast path: whole (C, S) slab per batch resident in VMEM, one pass.
    # HBM traffic = read |x| + write |x| (2x instead of 3x).
    # ------------------------------------------------------------------
    if use_fused:
        def fused_kernel(x_ref, w1t_ref, w2_ref, o_ref):
            xb = x_ref[0]                                                # (C, S)
            pooled = jnp.sum(xb, axis=-1, keepdims=True,
                             dtype=jnp.float32) * inv_S                  # (C, 1)
            # Excitation without MXU / transposes: contractions are expressed as
            # broadcast-multiplies followed by sublane / lane reductions.
            w1t = w1t_ref[...].astype(jnp.float32)                       # (C, Cr) = W1.T
            w2f = w2_ref[...].astype(jnp.float32)                        # (C, Cr) = W2
            h = jnp.sum(w1t * pooled, axis=0, keepdims=True)             # (1, Cr) = (W1 @ pooled).T
            h = jnp.maximum(h, 0.0)
            logits = jnp.sum(w2f * h, axis=-1, keepdims=True)            # (C, 1) = W2 @ h
            gate = jax.nn.sigmoid(logits)
            o_ref[0] = xb * gate.astype(o_ref.dtype)

        out = pl.pallas_call(
            fused_kernel,
            out_shape=jax.ShapeDtypeStruct((B, C, S), x.dtype),
            grid_spec=pl.GridSpec(
                grid=(B,),
                in_specs=[
                    pl.BlockSpec((1, C, S), lambda b: (b, 0, 0)),
                    pl.BlockSpec((C, Cr), lambda b: (0, 0)),   # W1.T
                    pl.BlockSpec((C, Cr), lambda b: (0, 0)),   # W2
                ],
                out_specs=pl.BlockSpec((1, C, S), lambda b: (b, 0, 0)),
            ),
            compiler_params=pltpu.CompilerParams(
                dimension_semantics=("parallel",),
                vmem_limit_bytes=vmem_limit,
            ),
            cost_estimate=pl.CostEstimate(
                flops=3 * B * C * S,
                transcendentals=B * C,
                bytes_accessed=2 * B * C * S * itemsize,
            ),
        )(xf, w1.T, w2)
        return out.reshape(B, C, D, H, W)

    # ------------------------------------------------------------------
    # Streaming path for large volumes: two lane-dense tiled passes.
    # ------------------------------------------------------------------
    LANE = 128
    S_lanes = pl.cdiv(S, LANE) * LANE
    full_c_lanes = ((per_buf_budget // max(1, C * itemsize)) // LANE) * LANE
    if full_c_lanes >= LANE:
        tC = C
        tS = int(min(full_c_lanes, S_lanes))
    else:
        # Very large C: tile channels too so a block stays inside the budget.
        tS = int(min(512, S_lanes))
        tc_budget = ((per_buf_budget // (tS * itemsize)) // 128) * 128
        tC = int(min(C, max(128, tc_budget)))
    tS = max(LANE, tS)
    n_s = pl.cdiv(S, tS)
    n_c = pl.cdiv(C, tC)
    needs_mask = (S % tS) != 0   # static: only pay for masking on ragged shapes

    # ---- Pass 1: per-(batch, spatial-block) partial sums -> (B, n_s, C, 1) f32.
    # Every grid axis is independent ("parallel"), so megacore can split on the
    # spatial axis even when B == 1 (v7x has 2 TensorCores).
    def pool_kernel(x_ref, psum_ref):
        xb = x_ref[0]                                                    # (tC, tS)
        if needs_mask:
            s = pl.program_id(2)
            valid = S - s * tS                                           # lanes with real data
            lane = jax.lax.broadcasted_iota(jnp.int32, xb.shape, 1)
            xb = jnp.where(lane < valid, xb, jnp.zeros((), xb.dtype))
        psum_ref[0, 0] = jnp.sum(xb, axis=-1, keepdims=True, dtype=jnp.float32)

    partial_sums = pl.pallas_call(
        pool_kernel,
        out_shape=jax.ShapeDtypeStruct((B, n_s, C, 1), jnp.float32),
        grid_spec=pl.GridSpec(
            grid=(B, n_c, n_s),
            in_specs=[pl.BlockSpec((1, tC, tS), lambda b, c, s: (b, c, s))],
            out_specs=pl.BlockSpec((1, 1, tC, 1), lambda b, c, s: (b, s, c, 0)),
        ),
        compiler_params=pltpu.CompilerParams(
            dimension_semantics=("parallel", "parallel", "parallel"),
            vmem_limit_bytes=vmem_limit,
        ),
        cost_estimate=pl.CostEstimate(
            flops=B * C * S,
            transcendentals=0,
            bytes_accessed=B * C * S * itemsize + B * n_s * C * 4,
        ),
    )(xf)

    # ---- Excitation: tiny; batched over B in plain JAX (MXU sees N=B).
    pooled = jnp.sum(partial_sums, axis=1)[:, :, 0] * inv_S              # (B, C) f32
    h = jnp.maximum(
        jnp.dot(pooled, w1.T.astype(jnp.float32),
                preferred_element_type=jnp.float32), 0.0)                # (B, C//r)
    scale = jax.nn.sigmoid(
        jnp.dot(h, w2.T.astype(jnp.float32),
                preferred_element_type=jnp.float32))                     # (B, C)
    scale = scale.reshape(B, C, 1)

    # ---- Pass 2: apply per-channel gate tile-by-tile in the native dtype.
    # Partial last blocks are handled by Pallas dropping out-of-bounds stores.
    def apply_kernel(scale_ref, x_ref, o_ref):
        o_ref[0] = x_ref[0] * scale_ref[0].astype(o_ref.dtype)

    out = pl.pallas_call(
        apply_kernel,
        out_shape=jax.ShapeDtypeStruct((B, C, S), x.dtype),
        grid_spec=pl.GridSpec(
            grid=(B, n_c, n_s),
            in_specs=[
                pl.BlockSpec((1, tC, 1), lambda b, c, s: (b, c, 0)),     # scale
                pl.BlockSpec((1, tC, tS), lambda b, c, s: (b, c, s)),    # x tile
            ],
            out_specs=pl.BlockSpec((1, tC, tS), lambda b, c, s: (b, c, s)),
        ),
        compiler_params=pltpu.CompilerParams(
            dimension_semantics=("parallel", "parallel", "parallel"),
            vmem_limit_bytes=vmem_limit,
        ),
        cost_estimate=pl.CostEstimate(
            flops=B * C * S,
            transcendentals=0,
            bytes_accessed=2 * B * C * S * itemsize + B * C * 4,
        ),
    )(scale, xf)

    return out.reshape(B, C, D, H, W)


# ---------------------------------------------------------------------------
# Reference + test
# ---------------------------------------------------------------------------

def reference(x, w1, w2):
    pooled = jnp.mean(x.astype(jnp.float32), axis=(2, 3, 4))             # (B, C)
    h = jnp.maximum(pooled @ w1.T.astype(jnp.float32), 0.0)              # (B, C//r)
    scale = jax.nn.sigmoid(h @ w2.T.astype(jnp.float32))                 # (B, C)
    return x * scale[:, :, None, None, None].astype(x.dtype)


if __name__ == "__main__":
    key = jax.random.PRNGKey(0)
    kx, k1, k2, kx2 = jax.random.split(key, 4)

    B, C, D, H, W = 2, 32, 8, 8, 8
    reduction = 16
    Cr = C // reduction

    x = jax.random.normal(kx, (B, C, D, H, W), dtype=jnp.float32)
    # PyTorch Linear stores (out_features, in_features).
    w1 = jax.random.normal(k1, (Cr, C), dtype=jnp.float32) * (1.0 / jnp.sqrt(C))
    w2 = jax.random.normal(k2, (C, Cr), dtype=jnp.float32) * (1.0 / jnp.sqrt(Cr))

    fn = jax.jit(attention_module_3d, static_argnames=("force_path",))

    # Default dispatch: small volume -> fused single-pass kernel.
    y = jax.block_until_ready(fn(x, w1, w2))
    y_ref = reference(x, w1, w2)
    assert y.shape == (B, C, D, H, W)
    assert jnp.allclose(y, y_ref, atol=1e-5, rtol=1e-5), "mismatch (fused path)"

    # Force the tiled streaming path (pool + apply kernels).
    y_t = jax.block_until_ready(fn(x, w1, w2, force_path="tiled"))
    assert jnp.allclose(y_t, y_ref, atol=1e-5, rtol=1e-5), "mismatch (tiled path)"

    # Ragged spatial size (not a multiple of 128): exercises the masked-tail path.
    D2, H2, W2 = 5, 6, 7
    x2 = jax.random.normal(kx2, (B, C, D2, H2, W2), dtype=jnp.float32)
    y2_ref = reference(x2, w1, w2)
    y2 = jax.block_until_ready(fn(x2, w1, w2))
    assert y2.shape == (B, C, D2, H2, W2)
    assert jnp.allclose(y2, y2_ref, atol=1e-5, rtol=1e-5), "mismatch (fused, ragged)"
    y2_t = jax.block_until_ready(fn(x2, w1, w2, force_path="tiled"))
    assert jnp.allclose(y2_t, y2_ref, atol=1e-5, rtol=1e-5), "mismatch (tiled, ragged)"

    print("KERNEL_OK")
</pallas_src>

<mosaic_0001>
module attributes {stable_mosaic.version = 11 : i64} {
  func.func @fused_kernel(%arg0: i32, %arg1: memref<1x32x512xf32, #tpu.memory_space<vmem>>, %arg2: memref<32x2xf32, #tpu.memory_space<vmem>>, %arg3: memref<32x2xf32, #tpu.memory_space<vmem>>, %arg4: memref<1x32x512xf32, #tpu.memory_space<vmem>>) attributes {dimension_semantics = [#tpu.dimension_semantics<parallel>], iteration_bounds = array<i64: 2>, scalar_prefetch = 0 : i64, scratch_operands = 0 : i64, tpu.core_type = #tpu.core_type<tc>, window_params = [{transform_indices = @transform_0, window_bounds = array<i64: 1, 32, 512>}, {pipeline_mode = #tpu.pipeline_mode<synchronous>, transform_indices = @transform_1, window_bounds = array<i64: 32, 2>}, {pipeline_mode = #tpu.pipeline_mode<synchronous>, transform_indices = @transform_2, window_bounds = array<i64: 32, 2>}, {transform_indices = @transform_3, window_bounds = array<i64: 1, 32, 512>}]} {
    %c0 = arith.constant 0 : index
    %c0_0 = arith.constant 0 : index
    %c0_1 = arith.constant 0 : index
    %0 = vector.load %arg1[%c0, %c0_0, %c0_1] : memref<1x32x512xf32, #tpu.memory_space<vmem>>, vector<1x32x512xf32>
    %1 = vector.shape_cast %0 : vector<1x32x512xf32> to vector<32x512xf32>
    %cst = arith.constant dense<0.000000e+00> : vector<32xf32>
    %2 = vector.multi_reduction <add>, %1, %cst [1] : vector<32x512xf32> to vector<32xf32>
    %3 = vector.shape_cast %2 : vector<32xf32> to vector<32x1xf32>
    %cst_2 = arith.constant 0.001953125 : f32
    %4 = vector.broadcast %cst_2 : f32 to vector<32x1xf32>
    %5 = arith.mulf %3, %4 : vector<32x1xf32>
    %c0_3 = arith.constant 0 : index
    %c0_4 = arith.constant 0 : index
    %6 = vector.load %arg2[%c0_3, %c0_4] : memref<32x2xf32, #tpu.memory_space<vmem>>, vector<32x2xf32>
    %c0_5 = arith.constant 0 : index
    %c0_6 = arith.constant 0 : index
    %7 = vector.load %arg3[%c0_5, %c0_6] : memref<32x2xf32, #tpu.memory_space<vmem>>, vector<32x2xf32>
    %8 = vector.broadcast %5 : vector<32x1xf32> to vector<32x2xf32>
    %9 = arith.mulf %6, %8 : vector<32x2xf32>
    %cst_7 = arith.constant dense<0.000000e+00> : vector<2xf32>
    %10 = vector.multi_reduction <add>, %9, %cst_7 [0] : vector<32x2xf32> to vector<2xf32>
    %11 = vector.shape_cast %10 : vector<2xf32> to vector<1x2xf32>
    %cst_8 = arith.constant 0.000000e+00 : f32
    %12 = vector.broadcast %cst_8 : f32 to vector<1x2xf32>
    %13 = arith.maximumf %11, %12 : vector<1x2xf32>
    %14 = vector.broadcast %13 : vector<1x2xf32> to vector<32x2xf32>
    %15 = arith.mulf %7, %14 : vector<32x2xf32>
    %cst_9 = arith.constant dense<0.000000e+00> : vector<32xf32>
    %16 = vector.multi_reduction <add>, %15, %cst_9 [1] : vector<32x2xf32> to vector<32xf32>
    %17 = vector.shape_cast %16 : vector<32xf32> to vector<32x1xf32>
    %18 = arith.negf %17 : vector<32x1xf32>
    %19 = math.exp %18 : vector<32x1xf32>
    %cst_10 = arith.constant 1.000000e+00 : f32
    %20 = vector.broadcast %cst_10 : f32 to vector<32x1xf32>
    %21 = arith.addf %20, %19 : vector<32x1xf32>
    %22 = arith.divf %20, %21 : vector<32x1xf32>
    %23 = vector.broadcast %22 : vector<32x1xf32> to vector<32x512xf32>
    %24 = arith.mulf %1, %23 : vector<32x512xf32>
    %c0_11 = arith.constant 0 : index
    %c0_12 = arith.constant 0 : index
    %c0_13 = arith.constant 0 : index
    %25 = vector.load %arg4[%c0_11, %c0_12, %c0_13] : memref<1x32x512xf32, #tpu.memory_space<vmem>>, vector<1x32x512xf32>
    %26 = vector.shape_cast %25 : vector<1x32x512xf32> to vector<32x512xf32>
    %27 = vector.shape_cast %24 : vector<32x512xf32> to vector<1x32x512xf32>
    tpu.vector_store %arg4[%c0_11, %c0_12, %c0_13], %27 {strides = array<i32>} : memref<1x32x512xf32, #tpu.memory_space<vmem>>, vector<1x32x512xf32>,
    return
  }
  func.func @transform_0(%arg0: i32) -> (i32, i32, i32) {
    %c0_i32 = arith.constant 0 : i32
    %c0_i32_0 = arith.constant 0 : i32
    %c0_i32_1 = arith.constant 0 : i32
    return %arg0, %c0_i32, %c0_i32_0 : i32, i32, i32
  }
  func.func @transform_1(%arg0: i32) -> (i32, i32) {
    %c0_i32 = arith.constant 0 : i32
    %c0_i32_0 = arith.constant 0 : i32
    %c0_i32_1 = arith.constant 0 : i32
    return %c0_i32, %c0_i32_0 : i32, i32
  }
  func.func @transform_2(%arg0: i32) -> (i32, i32) {
    %c0_i32 = arith.constant 0 : i32
    %c0_i32_0 = arith.constant 0 : i32
    %c0_i32_1 = arith.constant 0 : i32
    return %c0_i32, %c0_i32_0 : i32, i32
  }
  func.func @transform_3(%arg0: i32) -> (i32, i32, i32) {
    %c0_i32 = arith.constant 0 : i32
    %c0_i32_0 = arith.constant 0 : i32
    %c0_i32_1 = arith.constant 0 : i32
    return %arg0, %c0_i32, %c0_i32_0 : i32, i32, i32
  }
}

</mosaic_0001>

<llo_original>
// kernel: attention_module_3d.1
$region0: #{attention_module_3d.1}
  #allocation0 [shape = 'u32[]', space=smem, size = 0x4, offset = 0x4, fixed_abs, tag = 'smem constant byte address 0x4 - core index']
  #allocation1 [shape = 'u32[144,128]{1,0:T(1,128)}', space=vmem, size = 0x12000, scoped, tag = 'internal scratch']
  %s0 = inlined_call_operand.vmem [shape: f32[2,32,512], index: 0, kind: input, shape index: {}]
  %s1 = inlined_call_operand.vmem [shape: f32[32,2], index: 1, kind: input, shape index: {}]
  %s2 = inlined_call_operand.vmem [shape: f32[32,2], index: 2, kind: input, shape index: {}]
  %s3 = inlined_call_operand.vmem [shape: f32[2,32,512], index: 3, kind: output, shape index: {}]
  %s4 = sld [smem:[#allocation0]]
  $region45: #{attention_module_3d.1} parent=0
    _
  %s6 = ssub.s32 1, %s4
  %s7 = scalar_select 0, %s6, %s4
  loop: start=0, step=1, limit=4
  $region2: #{attention_module_3d.1} parent=0 // loop_pre_header
    _
  $region3: #{attention_module_3d.1} parent=0 // loop_header
    %s9 = sphi 0, %s13
    %p10 = scmp.ge.s32.totalorder %s9, 4
    %s19 = sphi 0, %s21
    %s22 = sphi 0, %s19
    %s23 = sphi 0, %s22
    %s39 = sphi 0, %s23
    %s43 = sphi 0, %s43
    %s45 = sphi 0, %s43
    %s46 = sphi 0, %s45
    %s60 = sphi 0, %s46
    %s64 = sphi 0, %s64
    %s66 = sphi 0, %s64
    %s67 = sphi 0, %s66
    %s81 = sphi 0, %s67
    %s87 = sphi 0, %s89
    %s90 = sphi 0, %s87
    %s91 = sphi 0, %s90
    %s107 = sphi 0, %s91
  $region4: #{attention_module_3d.1} parent=0 // loop_header_branch
    %12 = sbr.rel (%p10) target = $region8
  $region5: #{attention_module_3d.1} parent=0 // loop_body
    %s14 = ssub.s32 %s9, 1
    %s15 = ssub.s32 %s9, 2
    %s16 = sadd.s32 %s9, 1
    %s17 = ssub.s32 %s9, %s16
    %p18 = scmp.eq.s32.totalorder %s17, 0
    %s20 = sadd.s32 %s19, 1
    %s21 = scalar_select %p18, %s19, %s20
    %p24 = pneg %p18
    %p25 = scmp.eq.s32.totalorder %s9, 1
    %p26 = por %p24, %p25
    %p27 = scmp.ne.s32.totalorder %s19, %s22
    %p28 = scmp.eq.s32.totalorder %s9, 0
    %p29 = por %p27, %p28
    %p30 = scmp.ne.s32.totalorder %s19, %s22
    %p31 = scmp.eq.s32.totalorder %s14, 1
    %p32 = por %p30, %p31
    %p33 = scmp.ne.s32.totalorder %s22, %s23
    %p34 = scmp.eq.s32.totalorder %s14, 0
    %p35 = por %p33, %p34
    %p36 = scmp.ne.s32.totalorder %s22, %s23
    %p37 = scmp.eq.s32.totalorder %s15, 1
    %p38 = por %p36, %p37
    %p40 = scmp.ne.s32.totalorder %s23, %s39
    %p41 = scmp.eq.s32.totalorder %s15, 0
    %p42 = por %p40, %p41
    %s44 = sadd.s32 %s43, 1
    %p47 = scmp.eq.s32.totalorder %s9, 1
    %p48 = scmp.ne.s32.totalorder %s43, %s45
    %p49 = scmp.eq.s32.totalorder %s9, 0
    %p50 = por %p48, %p49
    %p51 = scmp.ne.s32.totalorder %s43, %s45
    %p52 = scmp.eq.s32.totalorder %s14, 1
    %p53 = por %p51, %p52
    %p54 = scmp.ne.s32.totalorder %s45, %s46
    %p55 = scmp.eq.s32.totalorder %s14, 0
    %p56 = por %p54, %p55
    %p57 = scmp.ne.s32.totalorder %s45, %s46
    %p58 = scmp.eq.s32.totalorder %s15, 1
    %p59 = por %p57, %p58
    %p61 = scmp.ne.s32.totalorder %s46, %s60
    %p62 = scmp.eq.s32.totalorder %s15, 0
    %p63 = por %p61, %p62
    %s65 = sadd.s32 %s64, 1
    %p68 = scmp.eq.s32.totalorder %s9, 1
    %p69 = scmp.ne.s32.totalorder %s64, %s66
    %p70 = scmp.eq.s32.totalorder %s9, 0
    %p71 = por %p69, %p70
    %p72 = scmp.ne.s32.totalorder %s64, %s66
    %p73 = scmp.eq.s32.totalorder %s14, 1
    %p74 = por %p72, %p73
    %p75 = scmp.ne.s32.totalorder %s66, %s67
    %p76 = scmp.eq.s32.totalorder %s14, 0
    %p77 = por %p75, %p76
    %p78 = scmp.ne.s32.totalorder %s66, %s67
    %p79 = scmp.eq.s32.totalorder %s15, 1
    %p80 = por %p78, %p79
    %p82 = scmp.ne.s32.totalorder %s67, %s81
    %p83 = scmp.eq.s32.totalorder %s15, 0
    %p84 = por %p82, %p83
    %s85 = ssub.s32 %s9, %s16
    %p86 = scmp.eq.s32.totalorder %s85, 0
    %s88 = sadd.s32 %s87, 1
    %s89 = scalar_select %p86, %s87, %s88
    %p92 = pneg %p86
    %p93 = scmp.eq.s32.totalorder %s9, 1
    %p94 = por %p92, %p93
    %p95 = scmp.ne.s32.totalorder %s87, %s90
    %p96 = scmp.eq.s32.totalorder %s9, 0
    %p97 = por %p95, %p96
    %p98 = scmp.ne.s32.totalorder %s87, %s90
    %p99 = scmp.eq.s32.totalorder %s14, 1
    %p100 = por %p98, %p99
    %p101 = scmp.ne.s32.totalorder %s90, %s91
    %p102 = scmp.eq.s32.totalorder %s14, 0
    %p103 = por %p101, %p102
    %p104 = scmp.ne.s32.totalorder %s90, %s91
    %p105 = scmp.eq.s32.totalorder %s15, 1
    %p106 = por %p104, %p105
    %p108 = scmp.ne.s32.totalorder %s91, %s107
    %p109 = scmp.eq.s32.totalorder %s15, 0
    %p110 = por %p108, %p109
    %p111 = scmp.le.s32.totalorder 1, %s9
    %p112 = scmp.lt.s32.totalorder %s9, 3
    %p113 = pnand %p111, %p112
    %p114 = pneg %p113
    // Predicated region
    $region9: #{attention_module_3d.1} parent=5 // pred_check
      _
    $region10: #{attention_module_3d.1} parent=5 // pred_check_branch
      %116 = sbr.rel (%p113) target = $region12
    $region11: #{attention_module_3d.1} parent=5 // pred_region
      %s117 = ssub.s32 %s9, 1
      // Predicated region
      $region13: #{attention_module_3d.1} parent=11 // pred_check
        %p118 = pneg %p56
      $region14: #{attention_module_3d.1} parent=11 // pred_check_branch
        %120 = sbr.rel (%p118) target = $region16
      $region15: #{attention_module_3d.1} parent=11 // pred_region
        _
      $region16: #{attention_module_3d.1} parent=11 // pred_fallthru
        _
      // Predicated region
      $region17: #{attention_module_3d.1} parent=11 // pred_check
        %p121 = pneg %p77
      $region18: #{attention_module_3d.1} parent=11 // pred_check_branch
        %123 = sbr.rel (%p121) target = $region20
      $region19: #{attention_module_3d.1} parent=11 // pred_region
        _
      $region20: #{attention_module_3d.1} parent=11 // pred_fallthru
        _
    $region12: #{attention_module_3d.1} parent=5 // pred_fallthru
      _
    %p124 = scmp.lt.s32.totalorder %s9, 2
    // Predicated region
    $region21: #{attention_module_3d.1} parent=5 // pred_check
      %p125 = pneg %p124
    $region22: #{attention_module_3d.1} parent=5 // pred_check_branch
      %127 = sbr.rel (%p125) target = $region24
    $region23: #{attention_module_3d.1} parent=5 // pred_region
      // Predicated region
      $region25: #{attention_module_3d.1} parent=23 // pred_check
        %p128 = pneg %p29
      $region26: #{attention_module_3d.1} parent=23 // pred_check_branch
        %130 = sbr.rel (%p128) target = $region28
      $region27: #{attention_module_3d.1} parent=23 // pred_region
        %p131 = scmp.lt.s32.totalorder %s9, 1
        %s132 = scalar_select %p131, %s9, 1
        %s133 = smul.addr %s132, 16
        %s134 = smul.addr %s133, 8
        %s135 = scalar_lea.vmem %s0, %s134
      $region28: #{attention_module_3d.1} parent=23 // pred_fallthru
        _
    $region24: #{attention_module_3d.1} parent=5 // pred_fallthru
      _
    %p136 = scmp.le.s32.totalorder 1, %s9
    %p137 = scmp.lt.s32.totalorder %s9, 3
    %p138 = pnand %p136, %p137
    %p139 = pneg %p138
    // Predicated region
    $region29: #{attention_module_3d.1} parent=5 // pred_check
      _
    $region30: #{attention_module_3d.1} parent=5 // pred_check_branch
      %141 = sbr.rel (%p138) target = $region32
    $region31: #{attention_module_3d.1} parent=5 // pred_region
      %s142 = ssub.s32 %s9, 1
      %p143 = scmp.lt.s32.totalorder %s14, 1
      %s144 = scalar_select %p143, %s14, 1
      %s145 = smul.addr %s144, 16
      %s146 = smul.addr %s145, 8
      %s147 = scalar_lea.vmem %s0, %s146
      %p148 = pneg %p35
      %p149 = pneg %p32
      %p150 = pneg %p56
      %p151 = pneg %p53
      %p152 = pneg %p77
      %p153 = pneg %p74
      %p154 = pneg %p103
      %p155 = pneg %p100
      %p156 = scmp.lt.s32.totalorder %s14, 1
      %s157 = scalar_select %p156, %s14, 1
      %s158 = smul.addr %s157, 16
      %s159 = smul.addr %s158, 8
      %s160 = scalar_lea.vmem %s3, %s159
      %p161 = scmp.lt.s32.totalorder %s14, 1
      %s162 = scalar_select %p161, %s14, 1
      %s163 = smul.addr %s162, 16
      %s164 = smul.addr %s163, 8
      %s165 = scalar_lea.vmem %s0, %s164
      %p166 = scmp.lt.s32.totalorder %s14, 1
      %s167 = scalar_select %p166, %s14, 1
      %s168 = smul.addr %s167, 16
      %s169 = smul.addr %s168, 8
      %s170 = scalar_lea.vmem %s3, %s169
      %v171 = vld [vmem:[%s165] sm:$0xff]
      %v172 = vld [vmem:[%s165 + $0x8] sm:$0xff]
      %v173 = vld [vmem:[%s165 + $0x10] sm:$0xff]
      %v174 = vld [vmem:[%s165 + $0x18] sm:$0xff]
      %v175 = vld [vmem:[%s165 + $0x20] sm:$0xff]
      %v176 = vld [vmem:[%s165 + $0x28] sm:$0xff]
      %v177 = vld [vmem:[%s165 + $0x30] sm:$0xff]
      %v178 = vld [vmem:[%s165 + $0x38] sm:$0xff]
      %v179 = vld [vmem:[%s165 + $0x40] sm:$0xff]
      %v180 = vld [vmem:[%s165 + $0x48] sm:$0xff]
      %v181 = vld [vmem:[%s165 + $0x50] sm:$0xff]
      %v182 = vld [vmem:[%s165 + $0x58] sm:$0xff]
      %v183 = vld [vmem:[%s165 + $0x60] sm:$0xff]
      %v184 = vld [vmem:[%s165 + $0x68] sm:$0xff]
      %v185 = vld [vmem:[%s165 + $0x70] sm:$0xff]
      %v186 = vld [vmem:[%s165 + $0x78] sm:$0xff]
      %v187 = vadd.f32 %v171, %v172
      %v188 = vadd.f32 %v187, %v173
      %v189 = vadd.f32 %v188, %v174
      %190 = vadd.xlane.f32.xlu0 %v189
      %v191 = vpop.xlane.xlu0 %190
      %v192 = vadd.f32 %v175, %v176
      %v193 = vadd.f32 %v192, %v177
      %v194 = vadd.f32 %v193, %v178
      %195 = vadd.xlane.f32.xlu0 %v194
      %v196 = vpop.xlane.xlu0 %195
      %v197 = vadd.f32 %v179, %v180
      %v198 = vadd.f32 %v197, %v181
      %v199 = vadd.f32 %v198, %v182
      %200 = vadd.xlane.f32.xlu0 %v199
      %v201 = vpop.xlane.xlu0 %200
      %v202 = vadd.f32 %v183, %v184
      %v203 = vadd.f32 %v202, %v185
      %v204 = vadd.f32 %v203, %v186
      %205 = vadd.xlane.f32.xlu0 %v204
      %v206 = vpop.xlane.xlu0 %205
      %v207 = vmul.f32 %v191, 0.001953125
      %v208 = vmul.f32 %v196, 0.001953125
      %v209 = vmul.f32 %v201, 0.001953125
      %v210 = vmul.f32 %v206, 0.001953125
      %v211 = vld [vmem:[%s1] sm:$0xff]
      %v212 = vld [vmem:[%s1 + $0x8] sm:$0xff]
      %v213 = vld [vmem:[%s1 + $0x10] sm:$0xff]
      %v214 = vld [vmem:[%s1 + $0x18] sm:$0xff]
      %v215 = vld [vmem:[%s2] sm:$0xff]
      %v216 = vld [vmem:[%s2 + $0x8] sm:$0xff]
      %v217 = vld [vmem:[%s2 + $0x10] sm:$0xff]
      %v218 = vld [vmem:[%s2 + $0x18] sm:$0xff]
      %v219 = vmul.f32 %v211, %v207
      %v220 = vmul.f32 %v212, %v208
      %v221 = vmul.f32 %v213, %v209
      %v222 = vmul.f32 %v214, %v210
      %vm223 = vcmask 15360
      %v224 = vsel %vm223, %v219, 0.0
      %v225 = vsel %vm223, %v220, 0.0
      %v226 = vadd.f32 %v224, %v225
      %v227 = vsel %vm223, %v221, 0.0
      %v228 = vadd.f32 %v226, %v227
      %v229 = vsel %vm223, %v222, 0.0
      %v230 = vadd.f32 %v228, %v229
      %v231 = vrot.slane %v230, 4
      %v232 = vadd.f32 %v230, %v231
      %v233 = vrot.slane %v232, 2
      %v234 = vadd.f32 %v232, %v233
      %v235 = vrot.slane %v234, 1
      %v236 = vadd.f32 %v234, %v235
      %v237 = vmax.f32 %v236, 0.0
      %v238 = vmul.f32 %v215, %v237
      %v239 = vmul.f32 %v216, %v237
      %v240 = vmul.f32 %v217, %v237
      %v241 = vmul.f32 %v218, %v237
      %v242 = vsel %vm223, %v238, 0.0
      %243 = vadd.xlane.f32.xlu0 %v242
      %v244 = vpop.xlane.xlu0 %243
      %v245 = vsel %vm223, %v239, 0.0
      %246 = vadd.xlane.f32.xlu0 %v245
      %v247 = vpop.xlane.xlu0 %246
      %v248 = vsel %vm223, %v240, 0.0
      %249 = vadd.xlane.f32.xlu0 %v248
      %v250 = vpop.xlane.xlu0 %249
      %v251 = vsel %vm223, %v241, 0.0
      %252 = vadd.xlane.f32.xlu0 %v251
      %v253 = vpop.xlane.xlu0 %252
      %v254 = vxor.u32 %v244, 2147483648
      %v255 = vxor.u32 %v247, 2147483648
      %v256 = vxor.u32 %v250, 2147483648
      %v257 = vxor.u32 %v253, 2147483648
      %v258 = vmul.f32 %v254, 1.442695
      %v259 = vpow.pop %v258
      %v260 = vmul.f32 %v255, 1.442695
      %v261 = vpow.pop %v260
      %v262 = vmul.f32 %v256, 1.442695
      %v263 = vpow.pop %v262
      %v264 = vmul.f32 %v257, 1.442695
      %v265 = vpow.pop %v264
      %v266 = vadd.f32 %v259, 1.0
      %v267 = vadd.f32 %v261, 1.0
      %v268 = vadd.f32 %v263, 1.0
      %v269 = vadd.f32 %v265, 1.0
      %v270 = vrcp.pop %v266
      %v271 = vmul.f32 1.0, %v270
      %v272 = vrcp.pop %v267
      %v273 = vmul.f32 1.0, %v272
      %v274 = vrcp.pop %v268
      %v275 = vmul.f32 1.0, %v274
      %v276 = vrcp.pop %v269
      %v277 = vmul.f32 1.0, %v276
      %v278 = vmul.f32 %v171, %v271
      %v279 = vmul.f32 %v172, %v271
      %v280 = vmul.f32 %v173, %v271
      %v281 = vmul.f32 %v174, %v271
      %v282 = vmul.f32 %v175, %v273
      %v283 = vmul.f32 %v176, %v273
      %v284 = vmul.f32 %v177, %v273
      %v285 = vmul.f32 %v178, %v273
      %v286 = vmul.f32 %v179, %v275
      %v287 = vmul.f32 %v180, %v275
      %v288 = vmul.f32 %v181, %v275
      %v289 = vmul.f32 %v182, %v275
      %v290 = vmul.f32 %v183, %v277
      %v291 = vmul.f32 %v184, %v277
      %v292 = vmul.f32 %v185, %v277
      %v293 = vmul.f32 %v186, %v277
      %294 = vst [vmem:[%s170] sm:$0xff] %v278
      %295 = vst [vmem:[%s170 + $0x8] sm:$0xff] %v279
      %296 = vst [vmem:[%s170 + $0x10] sm:$0xff] %v280
      %297 = vst [vmem:[%s170 + $0x18] sm:$0xff] %v281
      %298 = vst [vmem:[%s170 + $0x20] sm:$0xff] %v282
      %299 = vst [vmem:[%s170 + $0x28] sm:$0xff] %v283
      %300 = vst [vmem:[%s170 + $0x30] sm:$0xff] %v284
      %301 = vst [vmem:[%s170 + $0x38] sm:$0xff] %v285
      %302 = vst [vmem:[%s170 + $0x40] sm:$0xff] %v286
      %303 = vst [vmem:[%s170 + $0x48] sm:$0xff] %v287
      %304 = vst [vmem:[%s170 + $0x50] sm:$0xff] %v288
      %305 = vst [vmem:[%s170 + $0x58] sm:$0xff] %v289
      %306 = vst [vmem:[%s170 + $0x60] sm:$0xff] %v290
      %307 = vst [vmem:[%s170 + $0x68] sm:$0xff] %v291
      %308 = vst [vmem:[%s170 + $0x70] sm:$0xff] %v292
      %309 = vst [vmem:[%s170 + $0x78] sm:$0xff] %v293
      %p310 = scmp.lt.s32.totalorder %s14, 1
      %s311 = scalar_select %p310, %s14, 1
      %s312 = smul.addr %s311, 16
      %s313 = smul.addr %s312, 8
      %s314 = scalar_lea.vmem %s3, %s313
      // Predicated region
      $region33: #{attention_module_3d.1} parent=31 // pred_check
        %p315 = pneg %p100
      $region34: #{attention_module_3d.1} parent=31 // pred_check_branch
        %317 = sbr.rel (%p315) target = $region36
      $region35: #{attention_module_3d.1} parent=31 // pred_region
        _
      $region36: #{attention_module_3d.1} parent=31 // pred_fallthru
        _
    $region32: #{attention_module_3d.1} parent=5 // pred_fallthru
      _
    %p318 = scmp.le.s32.totalorder 2, %s9
    // Predicated region
    $region37: #{attention_module_3d.1} parent=5 // pred_check
      %p319 = pneg %p318
    $region38: #{attention_module_3d.1} parent=5 // pred_check_branch
      %321 = sbr.rel (%p319) target = $region40
    $region39: #{attention_module_3d.1} parent=5 // pred_region
      %s322 = ssub.s32 %s9, 2
      // Predicated region
      $region41: #{attention_module_3d.1} parent=39 // pred_check
        %p323 = pneg %p106
      $region42: #{attention_module_3d.1} parent=39 // pred_check_branch
        %325 = sbr.rel (%p323) target = $region44
      $region43: #{attention_module_3d.1} parent=39 // pred_region
        %p326 = scmp.lt.s32.totalorder %s15, 1
        %s327 = scalar_select %p326, %s15, 1
        %s328 = smul.addr %s327, 16
        %s329 = smul.addr %s328, 8
        %s330 = scalar_lea.vmem %s3, %s329
      $region44: #{attention_module_3d.1} parent=39 // pred_fallthru
        _
    $region40: #{attention_module_3d.1} parent=5 // pred_fallthru
      _
  $region6: #{attention_module_3d.1} parent=0 // loop_footer
    %s13 = sadd.s32 1, %s9
  $region7: #{attention_module_3d.1} parent=0 // loop_footer_branch
    %8 = sbr.rel target = $region3
  $region8: #{attention_module_3d.1} parent=0 // loop_exit
    _

</llo_original>
